<compile_context>
chip_gen: v5e
topology: v5e:2x2
jax: 0.10.0
libtpu: 0.0.40
codegen_flags: <defaults>
</compile_context>

<pallas_src>
import functools

import jax
import jax.numpy as jnp
from jax.experimental import pallas as pl
from jax.experimental.pallas import tpu as pltpu

HIDDEN = (512, 256, 128)


def _round_up(n, m):
    return ((n + m - 1) // m) * m


def _as_bf16(a):
    # Static dtype check: emits nothing if params were already prepared.
    return a if a.dtype == jnp.bfloat16 else a.astype(jnp.bfloat16)


def mlp_encoder_kernel(x_ref, w1_ref, b1_ref, w2_ref, b2_ref,
                       w3_ref, b3_ref, w4_ref, b4_ref, o_ref):
    # MXU inputs are bf16; every dot accumulates in f32. Bias + ReLU run in
    # f32 on the VPU, then cast back to bf16 for the next MXU pass.
    x = x_ref[...].astype(jnp.bfloat16)               # in-kernel cast (VPU filler)

    h = jnp.dot(x, w1_ref[...], preferred_element_type=jnp.float32) + b1_ref[...]
    h = jnp.maximum(h, 0.0).astype(jnp.bfloat16)      # ReLU; Dropout = identity (eval)

    h = jnp.dot(h, w2_ref[...], preferred_element_type=jnp.float32) + b2_ref[...]
    h = jnp.maximum(h, 0.0).astype(jnp.bfloat16)

    h = jnp.dot(h, w3_ref[...], preferred_element_type=jnp.float32) + b3_ref[...]
    h = jnp.maximum(h, 0.0).astype(jnp.bfloat16)

    out = jnp.dot(h, w4_ref[...], preferred_element_type=jnp.float32) + b4_ref[...]
    o_ref[...] = out.astype(o_ref.dtype)              # direct latent_dim store


def prepare_params(params):
    """One-time prep: cast MXU weight operands to bf16 (biases stay f32)."""
    prepared = dict(params)
    for i in range(1, 5):
        prepared[f"w{i}"] = params[f"w{i}"].astype(jnp.bfloat16)
    return prepared


@functools.partial(jax.jit, static_argnames=("block_b",))
def mlp_encoder(x, params, block_b=1024):
    """x: (B, input_dim) f32. params: dict of (in,out) weights and (1,out) biases.

    Pass prepare_params(params) to avoid per-call weight conversion.
    """
    B, input_dim = x.shape
    latent_dim = params["w4"].shape[1]

    # Batch tiling: big blocks amortize per-step overhead (v5e/v6e), but keep
    # at least 2 grid steps when possible so v7x's two TensorCores both work.
    if B >= 16:
        block_b = min(block_b, _round_up(pl.cdiv(B, 2), 8))
    else:
        block_b = B
    grid = (pl.cdiv(B, block_b),)

    w1 = _as_bf16(params["w1"])
    w2 = _as_bf16(params["w2"])
    w3 = _as_bf16(params["w3"])
    w4 = _as_bf16(params["w4"])
    b1, b2, b3, b4 = params["b1"], params["b2"], params["b3"], params["b4"]

    def x_map(i):
        return (i, 0)

    def full_map(i):
        return (0, 0)

    in_specs = [
        pl.BlockSpec((block_b, input_dim), x_map),    # x tile over batch
        pl.BlockSpec(w1.shape, full_map),             # weights/biases resident
        pl.BlockSpec(b1.shape, full_map),
        pl.BlockSpec(w2.shape, full_map),
        pl.BlockSpec(b2.shape, full_map),
        pl.BlockSpec(w3.shape, full_map),
        pl.BlockSpec(b3.shape, full_map),
        pl.BlockSpec(w4.shape, full_map),
        pl.BlockSpec(b4.shape, full_map),
    ]
    out_spec = pl.BlockSpec((block_b, latent_dim), x_map)

    # Scheduling hint: this call is small enough to be latency/overhead bound.
    flops = 2 * B * (input_dim * HIDDEN[0]
                     + HIDDEN[0] * HIDDEN[1]
                     + HIDDEN[1] * HIDDEN[2]
                     + HIDDEN[2] * latent_dim)
    weight_bytes = 2 * (w1.size + w2.size + w3.size + w4.size)      # bf16
    bias_bytes = 4 * (b1.size + b2.size + b3.size + b4.size)        # f32
    bytes_accessed = 4 * x.size + weight_bytes + bias_bytes + 4 * B * latent_dim
    cost = pl.CostEstimate(flops=flops, transcendentals=0,
                           bytes_accessed=bytes_accessed)

    return pl.pallas_call(
        mlp_encoder_kernel,
        out_shape=jax.ShapeDtypeStruct((B, latent_dim), x.dtype),
        grid=grid,
        in_specs=in_specs,
        out_specs=out_spec,
        compiler_params=pltpu.CompilerParams(
            # batch axis is independent -> shards across TCs on v7x megacore
            dimension_semantics=("parallel",),
        ),
        cost_estimate=cost,
    )(x, w1, b1, w2, b2, w3, b3, w4, b4)


def init_params(key, input_dim, latent_dim):
    """Deterministic PyTorch-style (Kaiming-uniform-ish) init; weights stored (in,out)."""
    dims = [(input_dim, HIDDEN[0]), (HIDDEN[0], HIDDEN[1]),
            (HIDDEN[1], HIDDEN[2]), (HIDDEN[2], latent_dim)]
    params = {}
    for idx, (din, dout) in enumerate(dims, start=1):
        key, kw, kb = jax.random.split(key, 3)
        bound = 1.0 / jnp.sqrt(jnp.float32(din))
        # PyTorch Linear.weight is (out,in); sample then transpose to (in,out).
        w = jax.random.uniform(kw, (dout, din), jnp.float32, -bound, bound).T
        b = jax.random.uniform(kb, (1, dout), jnp.float32, -bound, bound)
        params[f"w{idx}"] = w
        params[f"b{idx}"] = b
    return params


def mlp_encoder_ref(x, params):
    """Pure-JAX reference with the same bf16-in / f32-accumulate numeric flow."""
    def dense(h, w, b):
        return jnp.dot(h.astype(jnp.bfloat16), w.astype(jnp.bfloat16),
                       preferred_element_type=jnp.float32) + b
    h = jnp.maximum(dense(x, params["w1"], params["b1"]), 0.0)
    h = jnp.maximum(dense(h, params["w2"], params["b2"]), 0.0)
    h = jnp.maximum(dense(h, params["w3"], params["b3"]), 0.0)
    return dense(h, params["w4"], params["b4"])


if __name__ == "__main__":
    key = jax.random.PRNGKey(0)
    batch, input_dim, latent_dim = 8, 64, 32

    key, kx = jax.random.split(key)
    x = jax.random.normal(kx, (batch, input_dim), jnp.float32)
    params = init_params(key, input_dim, latent_dim)

    # One-time weight prep (bf16 cast) outside the per-call path.
    prepared = prepare_params(params)

    out = mlp_encoder(x, prepared)
    out = jax.block_until_ready(out)

    ref = mlp_encoder_ref(x, params)
    assert out.shape == (batch, latent_dim)
    assert jnp.allclose(out, ref, atol=2e-2, rtol=2e-2), "mismatch vs JAX reference"

    print("KERNEL_OK")
</pallas_src>

<mosaic_0001>
module attributes {stable_mosaic.version = 11 : i64} {
  func.func @mlp_encoder_kernel(%arg0: i32, %arg1: memref<8x64xf32, #tpu.memory_space<vmem>>, %arg2: memref<64x512xbf16, #tpu.memory_space<vmem>>, %arg3: memref<1x512xf32, #tpu.memory_space<vmem>>, %arg4: memref<512x256xbf16, #tpu.memory_space<vmem>>, %arg5: memref<1x256xf32, #tpu.memory_space<vmem>>, %arg6: memref<256x128xbf16, #tpu.memory_space<vmem>>, %arg7: memref<1x128xf32, #tpu.memory_space<vmem>>, %arg8: memref<128x32xbf16, #tpu.memory_space<vmem>>, %arg9: memref<1x32xf32, #tpu.memory_space<vmem>>, %arg10: memref<8x32xf32, #tpu.memory_space<vmem>>) attributes {dimension_semantics = [#tpu.dimension_semantics<parallel>], iteration_bounds = array<i64: 1>, scalar_prefetch = 0 : i64, scratch_operands = 0 : i64, tpu.core_type = #tpu.core_type<tc>, window_params = [{transform_indices = @transform_0, window_bounds = array<i64: 8, 64>}, {pipeline_mode = #tpu.pipeline_mode<synchronous>, transform_indices = @transform_1, window_bounds = array<i64: 64, 512>}, {pipeline_mode = #tpu.pipeline_mode<synchronous>, transform_indices = @transform_2, window_bounds = array<i64: 1, 512>}, {pipeline_mode = #tpu.pipeline_mode<synchronous>, transform_indices = @transform_3, window_bounds = array<i64: 512, 256>}, {pipeline_mode = #tpu.pipeline_mode<synchronous>, transform_indices = @transform_4, window_bounds = array<i64: 1, 256>}, {pipeline_mode = #tpu.pipeline_mode<synchronous>, transform_indices = @transform_5, window_bounds = array<i64: 256, 128>}, {pipeline_mode = #tpu.pipeline_mode<synchronous>, transform_indices = @transform_6, window_bounds = array<i64: 1, 128>}, {pipeline_mode = #tpu.pipeline_mode<synchronous>, transform_indices = @transform_7, window_bounds = array<i64: 128, 32>}, {pipeline_mode = #tpu.pipeline_mode<synchronous>, transform_indices = @transform_8, window_bounds = array<i64: 1, 32>}, {transform_indices = @transform_9, window_bounds = array<i64: 8, 32>}]} {
    %c0 = arith.constant 0 : index
    %c0_0 = arith.constant 0 : index
    %0 = vector.load %arg1[%c0, %c0_0] : memref<8x64xf32, #tpu.memory_space<vmem>>, vector<8x64xf32>
    %1 = arith.truncf %0 : vector<8x64xf32> to vector<8x64xbf16>
    %c0_1 = arith.constant 0 : index
    %c0_2 = arith.constant 0 : index
    %2 = vector.load %arg2[%c0_1, %c0_2] : memref<64x512xbf16, #tpu.memory_space<vmem>>, vector<64x512xbf16>
    %cst = arith.constant dense<0.000000e+00> : vector<8x512xf32>
    %3 = tpu.matmul %1, %2, %cst {dimension_numbers = #tpu.dot_dimension_numbers<[1], [0], [0], [1], [0, 0, 1, 1], [], []>} : vector<8x64xbf16>, vector<64x512xbf16>, vector<8x512xf32> -> vector<8x512xf32>
    %c0_3 = arith.constant 0 : index
    %c0_4 = arith.constant 0 : index
    %4 = vector.load %arg3[%c0_3, %c0_4] : memref<1x512xf32, #tpu.memory_space<vmem>>, vector<1x512xf32>
    %5 = vector.broadcast %4 : vector<1x512xf32> to vector<8x512xf32>
    %6 = arith.addf %3, %5 : vector<8x512xf32>
    %cst_5 = arith.constant 0.000000e+00 : f32
    %7 = vector.broadcast %cst_5 : f32 to vector<8x512xf32>
    %8 = arith.maximumf %6, %7 : vector<8x512xf32>
    %9 = arith.truncf %8 : vector<8x512xf32> to vector<8x512xbf16>
    %c0_6 = arith.constant 0 : index
    %c0_7 = arith.constant 0 : index
    %10 = vector.load %arg4[%c0_6, %c0_7] : memref<512x256xbf16, #tpu.memory_space<vmem>>, vector<512x256xbf16>
    %cst_8 = arith.constant dense<0.000000e+00> : vector<8x256xf32>
    %11 = tpu.matmul %9, %10, %cst_8 {dimension_numbers = #tpu.dot_dimension_numbers<[1], [0], [0], [1], [0, 0, 1, 1], [], []>} : vector<8x512xbf16>, vector<512x256xbf16>, vector<8x256xf32> -> vector<8x256xf32>
    %c0_9 = arith.constant 0 : index
    %c0_10 = arith.constant 0 : index
    %12 = vector.load %arg5[%c0_9, %c0_10] : memref<1x256xf32, #tpu.memory_space<vmem>>, vector<1x256xf32>
    %13 = vector.broadcast %12 : vector<1x256xf32> to vector<8x256xf32>
    %14 = arith.addf %11, %13 : vector<8x256xf32>
    %cst_11 = arith.constant 0.000000e+00 : f32
    %15 = vector.broadcast %cst_11 : f32 to vector<8x256xf32>
    %16 = arith.maximumf %14, %15 : vector<8x256xf32>
    %17 = arith.truncf %16 : vector<8x256xf32> to vector<8x256xbf16>
    %c0_12 = arith.constant 0 : index
    %c0_13 = arith.constant 0 : index
    %18 = vector.load %arg6[%c0_12, %c0_13] : memref<256x128xbf16, #tpu.memory_space<vmem>>, vector<256x128xbf16>
    %cst_14 = arith.constant dense<0.000000e+00> : vector<8x128xf32>
    %19 = tpu.matmul %17, %18, %cst_14 {dimension_numbers = #tpu.dot_dimension_numbers<[1], [0], [0], [1], [0, 0, 1, 1], [], []>} : vector<8x256xbf16>, vector<256x128xbf16>, vector<8x128xf32> -> vector<8x128xf32>
    %c0_15 = arith.constant 0 : index
    %c0_16 = arith.constant 0 : index
    %20 = vector.load %arg7[%c0_15, %c0_16] : memref<1x128xf32, #tpu.memory_space<vmem>>, vector<1x128xf32>
    %21 = vector.broadcast %20 : vector<1x128xf32> to vector<8x128xf32>
    %22 = arith.addf %19, %21 : vector<8x128xf32>
    %cst_17 = arith.constant 0.000000e+00 : f32
    %23 = vector.broadcast %cst_17 : f32 to vector<8x128xf32>
    %24 = arith.maximumf %22, %23 : vector<8x128xf32>
    %25 = arith.truncf %24 : vector<8x128xf32> to vector<8x128xbf16>
    %c0_18 = arith.constant 0 : index
    %c0_19 = arith.constant 0 : index
    %26 = vector.load %arg8[%c0_18, %c0_19] : memref<128x32xbf16, #tpu.memory_space<vmem>>, vector<128x32xbf16>
    %cst_20 = arith.constant dense<0.000000e+00> : vector<8x32xf32>
    %27 = tpu.matmul %25, %26, %cst_20 {dimension_numbers = #tpu.dot_dimension_numbers<[1], [0], [0], [1], [0, 0, 1, 1], [], []>} : vector<8x128xbf16>, vector<128x32xbf16>, vector<8x32xf32> -> vector<8x32xf32>
    %c0_21 = arith.constant 0 : index
    %c0_22 = arith.constant 0 : index
    %28 = vector.load %arg9[%c0_21, %c0_22] : memref<1x32xf32, #tpu.memory_space<vmem>>, vector<1x32xf32>
    %29 = vector.broadcast %28 : vector<1x32xf32> to vector<8x32xf32>
    %30 = arith.addf %27, %29 : vector<8x32xf32>
    %c0_23 = arith.constant 0 : index
    %c0_24 = arith.constant 0 : index
    %31 = vector.load %arg10[%c0_23, %c0_24] : memref<8x32xf32, #tpu.memory_space<vmem>>, vector<8x32xf32>
    tpu.vector_store %arg10[%c0_23, %c0_24], %30 {strides = array<i32>} : memref<8x32xf32, #tpu.memory_space<vmem>>, vector<8x32xf32>,
    return
  }
  func.func @transform_0(%arg0: i32) -> (i32, i32) {
    %c0_i32 = arith.constant 0 : i32
    %c0_i32_0 = arith.constant 0 : i32
    return %arg0, %c0_i32 : i32, i32
  }
  func.func @transform_1(%arg0: i32) -> (i32, i32) {
    %c0_i32 = arith.constant 0 : i32
    %c0_i32_0 = arith.constant 0 : i32
    %c0_i32_1 = arith.constant 0 : i32
    return %c0_i32, %c0_i32_0 : i32, i32
  }
  func.func @transform_2(%arg0: i32) -> (i32, i32) {
    %c0_i32 = arith.constant 0 : i32
    %c0_i32_0 = arith.constant 0 : i32
    %c0_i32_1 = arith.constant 0 : i32
    return %c0_i32, %c0_i32_0 : i32, i32
  }
  func.func @transform_3(%arg0: i32) -> (i32, i32) {
    %c0_i32 = arith.constant 0 : i32
    %c0_i32_0 = arith.constant 0 : i32
    %c0_i32_1 = arith.constant 0 : i32
    return %c0_i32, %c0_i32_0 : i32, i32
  }
  func.func @transform_4(%arg0: i32) -> (i32, i32) {
    %c0_i32 = arith.constant 0 : i32
    %c0_i32_0 = arith.constant 0 : i32
    %c0_i32_1 = arith.constant 0 : i32
    return %c0_i32, %c0_i32_0 : i32, i32
  }
  func.func @transform_5(%arg0: i32) -> (i32, i32) {
    %c0_i32 = arith.constant 0 : i32
    %c0_i32_0 = arith.constant 0 : i32
    %c0_i32_1 = arith.constant 0 : i32
    return %c0_i32, %c0_i32_0 : i32, i32
  }
  func.func @transform_6(%arg0: i32) -> (i32, i32) {
    %c0_i32 = arith.constant 0 : i32
    %c0_i32_0 = arith.constant 0 : i32
    %c0_i32_1 = arith.constant 0 : i32
    return %c0_i32, %c0_i32_0 : i32, i32
  }
  func.func @transform_7(%arg0: i32) -> (i32, i32) {
    %c0_i32 = arith.constant 0 : i32
    %c0_i32_0 = arith.constant 0 : i32
    %c0_i32_1 = arith.constant 0 : i32
    return %c0_i32, %c0_i32_0 : i32, i32
  }
  func.func @transform_8(%arg0: i32) -> (i32, i32) {
    %c0_i32 = arith.constant 0 : i32
    %c0_i32_0 = arith.constant 0 : i32
    %c0_i32_1 = arith.constant 0 : i32
    return %c0_i32, %c0_i32_0 : i32, i32
  }
  func.func @transform_9(%arg0: i32) -> (i32, i32) {
    %c0_i32 = arith.constant 0 : i32
    %c0_i32_0 = arith.constant 0 : i32
    return %arg0, %c0_i32 : i32, i32
  }
}

</mosaic_0001>

<llo_original>
// kernel: mlp_encoder.1
$region0: #{mlp_encoder.1}
  #allocation0 [shape = 'u32[]', space=smem, size = 0x4, offset = 0x4, fixed_abs, tag = 'smem constant byte address 0x4 - core index']
  #allocation1 [shape = 'u32[72,128]{1,0:T(1,128)}', space=vmem, size = 0x9000, scoped, tag = 'internal scratch']
  %s0 = inlined_call_operand.vmem [shape: f32[8,64], index: 0, kind: input, shape index: {}]
  %s1 = inlined_call_operand.hbm [shape: bf16[64,512], index: 1, kind: input, shape index: {}]
  %s2 = inlined_call_operand.vmem [shape: f32[1,512], index: 2, kind: input, shape index: {}]
  %s3 = inlined_call_operand.hbm [shape: bf16[512,256], index: 3, kind: input, shape index: {}]
  %s4 = inlined_call_operand.vmem [shape: f32[1,256], index: 4, kind: input, shape index: {}]
  %s5 = inlined_call_operand.hbm [shape: bf16[256,128], index: 5, kind: input, shape index: {}]
  %s6 = inlined_call_operand.vmem [shape: f32[1,128], index: 6, kind: input, shape index: {}]
  %s7 = inlined_call_operand.vmem [shape: bf16[128,32], index: 7, kind: input, shape index: {}]
  %s8 = inlined_call_operand.vmem [shape: f32[1,32], index: 8, kind: input, shape index: {}]
  %s9 = inlined_call_operand.hbm [shape: f32[8,32], index: 9, kind: output, shape index: {}]
  %s10 = sld [smem:[#allocation0]]
  $region58: #{mlp_encoder.1} parent=0
    _
  %s12 = ssub.s32 1, %s10
  %s13 = scalar_select 0, %s12, %s10
  $region1: #{mlp_encoder.1} parent=0
    #allocation2 [shape = 'u8[65536]{0}', space=vmem, size = 0x10000, scoped, tag = 'input window, operand 1, single buffered']
    #allocation3 [shape = 's32[1]{0}', space=sflag, size = 0x4, scoped, tag = 'scoped memory for mlp_encoder.1']
    #allocation4 [shape = 's32[1]{0}', space=sflag, size = 0x4, scoped, tag = 'scoped memory for mlp_encoder.1']
    #allocation5 [shape = 'u8[262144]{0}', space=vmem, size = 0x40000, scoped, tag = 'input window, operand 3, single buffered']
    #allocation6 [shape = 's32[1]{0}', space=sflag, size = 0x4, scoped, tag = 'scoped memory for mlp_encoder.1']
    #allocation7 [shape = 'u8[65536]{0}', space=vmem, size = 0x10000, scoped, tag = 'input window, operand 5, single buffered']
    #allocation8 [shape = 'u8[4096]{0}', space=vmem, size = 0x1000, scoped, tag = 'output window, operand 0, single buffered']
    %14 = vsyncpa [#allocation3], 0
    %15 = vsyncpa [#allocation6], 0
    %16 = vsyncpa [#allocation4], 0
    // Predicated region
    $region2: #{mlp_encoder.1} parent=1 // pred_check
      _
    $region3: #{mlp_encoder.1} parent=1 // pred_check_branch
      %18 = sbr.rel (0) target = $region5
    $region4: #{mlp_encoder.1} parent=1 // pred_region
      _
    $region5: #{mlp_encoder.1} parent=1 // pred_fallthru
      _
    // Predicated region
    $region6: #{mlp_encoder.1} parent=1 // pred_check
      _
    $region7: #{mlp_encoder.1} parent=1 // pred_check_branch
      %20 = sbr.rel (0) target = $region9
    $region8: #{mlp_encoder.1} parent=1 // pred_region
      %22 = vsyncadd [#allocation3], 0
      %s23 = sshll.u32 %s1, 4
      %s24 = int_to_ptr.hbm [resolvable:$true] %s23
      %s25 = sshll.u32 [#allocation2], 4
      %s26 = int_to_ptr.vmem [resolvable:$true] %s25
      %31 = dma.hbm_to_vmem [thread:$0]  %s24, 2048, %s26, [#allocation3], 256, 256, 16
    $region9: #{mlp_encoder.1} parent=1 // pred_fallthru
      _
    // Predicated region
    $region10: #{mlp_encoder.1} parent=1 // pred_check
      _
    $region11: #{mlp_encoder.1} parent=1 // pred_check_branch
      %33 = sbr.rel (0) target = $region13
    $region12: #{mlp_encoder.1} parent=1 // pred_region
      _
    $region13: #{mlp_encoder.1} parent=1 // pred_fallthru
      _
    // Predicated region
    $region14: #{mlp_encoder.1} parent=1 // pred_check
      _
    $region15: #{mlp_encoder.1} parent=1 // pred_check_branch
      %35 = sbr.rel (0) target = $region17
    $region16: #{mlp_encoder.1} parent=1 // pred_region
      %37 = vsyncadd [#allocation6], 0
      %s38 = sshll.u32 %s3, 4
      %s39 = int_to_ptr.hbm [resolvable:$true] %s38
      %s40 = sshll.u32 [#allocation5], 4
      %s41 = int_to_ptr.vmem [resolvable:$true] %s40
      %46 = dma.hbm_to_vmem [thread:$0]  %s39, 8192, %s41, [#allocation6], 128, 128, 8
    $region17: #{mlp_encoder.1} parent=1 // pred_fallthru
      _
    // Predicated region
    $region18: #{mlp_encoder.1} parent=1 // pred_check
      _
    $region19: #{mlp_encoder.1} parent=1 // pred_check_branch
      %48 = sbr.rel (0) target = $region21
    $region20: #{mlp_encoder.1} parent=1 // pred_region
      _
    $region21: #{mlp_encoder.1} parent=1 // pred_fallthru
      _
    // Predicated region
    $region22: #{mlp_encoder.1} parent=1 // pred_check
      _
    $region23: #{mlp_encoder.1} parent=1 // pred_check_branch
      %50 = sbr.rel (0) target = $region25
    $region24: #{mlp_encoder.1} parent=1 // pred_region
      %52 = vsyncadd [#allocation6], 0
      %s53 = sshll.u32 %s5, 4
      %s54 = int_to_ptr.hbm [resolvable:$true] %s53
      %s55 = sshll.u32 [#allocation7], 4
      %s56 = int_to_ptr.vmem [resolvable:$true] %s55
      %61 = dma.hbm_to_vmem [thread:$0]  %s54, 2048, %s56, [#allocation6], 64, 64, 4
    $region25: #{mlp_encoder.1} parent=1 // pred_fallthru
      _
    // Predicated region
    $region26: #{mlp_encoder.1} parent=1 // pred_check
      _
    $region27: #{mlp_encoder.1} parent=1 // pred_check_branch
      %63 = sbr.rel (0) target = $region29
    $region28: #{mlp_encoder.1} parent=1 // pred_region
      _
    $region29: #{mlp_encoder.1} parent=1 // pred_fallthru
      _
    // Predicated region
    $region30: #{mlp_encoder.1} parent=1 // pred_check
      _
    $region31: #{mlp_encoder.1} parent=1 // pred_check_branch
      %65 = sbr.rel (0) target = $region33
    $region32: #{mlp_encoder.1} parent=1 // pred_region
      _
    $region33: #{mlp_encoder.1} parent=1 // pred_fallthru
      _
    // Predicated region
    $region34: #{mlp_encoder.1} parent=1 // pred_check
      _
    $region35: #{mlp_encoder.1} parent=1 // pred_check_branch
      %67 = sbr.rel (0) target = $region37
    $region36: #{mlp_encoder.1} parent=1 // pred_region
      _
    $region37: #{mlp_encoder.1} parent=1 // pred_fallthru
      _
    // Predicated region
    $region38: #{mlp_encoder.1} parent=1 // pred_check
      _
    $region39: #{mlp_encoder.1} parent=1 // pred_check_branch
      %69 = sbr.rel (0) target = $region41
    $region40: #{mlp_encoder.1} parent=1 // pred_region
      %71 = dma.done [#allocation3], 2048
    $region41: #{mlp_encoder.1} parent=1 // pred_fallthru
      _
    // Predicated region
    $region42: #{mlp_encoder.1} parent=1 // pred_check
      _
    $region43: #{mlp_encoder.1} parent=1 // pred_check_branch
      %73 = sbr.rel (0) target = $region45
    $region44: #{mlp_encoder.1} parent=1 // pred_region
      %75 = dma.done [#allocation6], 8192
    $region45: #{mlp_encoder.1} parent=1 // pred_fallthru
      _
    // Predicated region
    $region46: #{mlp_encoder.1} parent=1 // pred_check
      _
    $region47: #{mlp_encoder.1} parent=1 // pred_check_branch
      %77 = sbr.rel (0) target = $region49
    $region48: #{mlp_encoder.1} parent=1 // pred_region
      %79 = dma.done [#allocation6], 2048
    $region49: #{mlp_encoder.1} parent=1 // pred_fallthru
      _
    %v81 = vld [vmem:[%s0] sm:$0xff]
    %v82 = vpack.c.bf16 %v81, %v81
    %v83 = vld [vmem:[#allocation2] sm:$0xff]
    %v84 = vld [vmem:[#allocation2 + $0x8] sm:$0xff]
    %v85 = vld [vmem:[#allocation2 + $0x10] sm:$0xff]
    %v86 = vld [vmem:[#allocation2 + $0x18] sm:$0xff]
    %v87 = vld [vmem:[#allocation2 + $0x20] sm:$0xff]
    %v88 = vld [vmem:[#allocation2 + $0x28] sm:$0xff]
    %v89 = vld [vmem:[#allocation2 + $0x30] sm:$0xff]
    %v90 = vld [vmem:[#allocation2 + $0x38] sm:$0xff]
    %v91 = vld [vmem:[#allocation2 + $0x40] sm:$0xff]
    %v92 = vld [vmem:[#allocation2 + $0x48] sm:$0xff]
    %v93 = vld [vmem:[#allocation2 + $0x50] sm:$0xff]
    %v94 = vld [vmem:[#allocation2 + $0x58] sm:$0xff]
    %v95 = vld [vmem:[#allocation2 + $0x60] sm:$0xff]
    %v96 = vld [vmem:[#allocation2 + $0x68] sm:$0xff]
    %v97 = vld [vmem:[#allocation2 + $0x70] sm:$0xff]
    %v98 = vld [vmem:[#allocation2 + $0x78] sm:$0xff]
    %v99 = vld [vmem:[%s2] sm:$0xf]
    %v101 = vperm.slane %v99, 0
    %v102 = vperm.slane %v99, 1
    %v103 = vperm.slane %v99, 2
    %v104 = vperm.slane %v99, 3
    %v125 = vunpack.c.l.b16 %v83
    %v126 = vunpack.c.h.b16 %v83
    %v127 = vunpack.c.l.b16 %v84
    %v128 = vunpack.c.h.b16 %v84
    %v129 = vunpack.c.l.b16 %v85
    %v130 = vunpack.c.h.b16 %v85
    %v131 = vunpack.c.l.b16 %v86
    %v132 = vunpack.c.h.b16 %v86
    %v133 = vunpack.c.l.b16 %v87
    %v134 = vunpack.c.h.b16 %v87
    %v135 = vunpack.c.l.b16 %v88
    %v136 = vunpack.c.h.b16 %v88
    %v137 = vunpack.c.l.b16 %v89
    %v138 = vunpack.c.h.b16 %v89
    %v139 = vunpack.c.l.b16 %v90
    %v140 = vunpack.c.h.b16 %v90
    %v141 = vunpack.c.l.b16 %v91
    %v142 = vunpack.c.h.b16 %v91
    %v143 = vunpack.c.l.b16 %v92
    %v144 = vunpack.c.h.b16 %v92
    %v145 = vunpack.c.l.b16 %v93
    %v146 = vunpack.c.h.b16 %v93
    %v147 = vunpack.c.l.b16 %v94
    %v148 = vunpack.c.h.b16 %v94
    %v149 = vunpack.c.l.b16 %v95
    %v150 = vunpack.c.h.b16 %v95
    %v151 = vunpack.c.l.b16 %v96
    %v152 = vunpack.c.h.b16 %v96
    %v153 = vunpack.c.l.b16 %v97
    %v154 = vunpack.c.h.b16 %v97
    %v155 = vunpack.c.l.b16 %v98
    %v156 = vunpack.c.h.b16 %v98
    %v157 = vpack.c.b16 %v129, %v125
    %v158 = vpack.c.b16 %v130, %v126
    %v159 = vpack.c.b16 %v131, %v127
    %v160 = vpack.c.b16 %v132, %v128
    %v161 = vpack.c.b16 %v137, %v133
    %v162 = vpack.c.b16 %v138, %v134
    %v163 = vpack.c.b16 %v139, %v135
    %v164 = vpack.c.b16 %v140, %v136
    %v165 = vpack.c.b16 %v145, %v141
    %v166 = vpack.c.b16 %v146, %v142
    %v167 = vpack.c.b16 %v147, %v143
    %v168 = vpack.c.b16 %v148, %v144
    %v169 = vpack.c.b16 %v153, %v149
    %v170 = vpack.c.b16 %v154, %v150
    %v171 = vpack.c.b16 %v155, %v151
    %v172 = vpack.c.b16 %v156, %v152
    %vm189 = vcmask 523264
    %v191 = vsel %vm189, %v82, 0
    %193 = vmatpush.bf16.msra.mxu0 0
    %194 = vmatpush.bf16.msra.mxu0 0
    %195 = vmatpush.bf16.msra.mxu0 0
    %196 = vmatpush.bf16.msra.mxu0 0
    %197 = vmatpush.bf16.msra.mxu0 %v169
    %198 = vmatpush.bf16.msra.mxu0 %v165
    %199 = vmatpush.bf16.msra.mxu0 %v161
    %200 = vmatpush.bf16.msra.mxu0 %v157
    %201 = vmatmul.bf16.gmra.mxu0 %v191
    %v202 = vpop.f32.mrf.mxu0
    %v203 = vadd.f32 %v101, %v202
    %v204 = vpop.f32.mrf.mxu0
    %205 = vdwg.mxu0
    %206 = vmatpush.bf16.msra.mxu0 0
    %207 = vmatpush.bf16.msra.mxu0 0
    %208 = vmatpush.bf16.msra.mxu0 0
    %209 = vmatpush.bf16.msra.mxu0 0
    %210 = vmatpush.bf16.msra.mxu0 %v170
    %211 = vmatpush.bf16.msra.mxu0 %v166
    %212 = vmatpush.bf16.msra.mxu0 %v162
    %213 = vmatpush.bf16.msra.mxu0 %v158
    %214 = vmatmul.bf16.gmra.mxu0 %v191
    %v215 = vpop.f32.mrf.mxu0
    %v216 = vadd.f32 %v102, %v215
    %v217 = vpop.f32.mrf.mxu0
    %218 = vdwg.mxu0
    %219 = vmatpush.bf16.msra.mxu0 0
    %220 = vmatpush.bf16.msra.mxu0 0
    %221 = vmatpush.bf16.msra.mxu0 0
    %222 = vmatpush.bf16.msra.mxu0 0
    %223 = vmatpush.bf16.msra.mxu0 %v171
    %224 = vmatpush.bf16.msra.mxu0 %v167
    %225 = vmatpush.bf16.msra.mxu0 %v163
    %226 = vmatpush.bf16.msra.mxu0 %v159
    %227 = vmatmul.bf16.gmra.mxu0 %v191
    %v228 = vpop.f32.mrf.mxu0
    %v229 = vadd.f32 %v103, %v228
    %v230 = vpop.f32.mrf.mxu0
    %231 = vdwg.mxu0
    %232 = vmatpush.bf16.msra.mxu0 0
    %233 = vmatpush.bf16.msra.mxu0 0
    %234 = vmatpush.bf16.msra.mxu0 0
    %235 = vmatpush.bf16.msra.mxu0 0
    %236 = vmatpush.bf16.msra.mxu0 %v172
    %237 = vmatpush.bf16.msra.mxu0 %v168
    %238 = vmatpush.bf16.msra.mxu0 %v164
    %239 = vmatpush.bf16.msra.mxu0 %v160
    %240 = vmatmul.bf16.gmra.mxu0 %v191
    %v241 = vpop.f32.mrf.mxu0
    %v242 = vadd.f32 %v104, %v241
    %v243 = vpop.f32.mrf.mxu0
    %244 = vdwg.mxu0
    %v245 = vmax.f32 %v203, 0.0
    %v246 = vmax.f32 %v216, 0.0
    %v247 = vmax.f32 %v229, 0.0
    %v248 = vmax.f32 %v242, 0.0
    %v249 = vpack.c.bf16 %v245, %v245
    %v250 = vpack.c.bf16 %v246, %v246
    %v251 = vpack.c.bf16 %v247, %v247
    %v252 = vpack.c.bf16 %v248, %v248
    %v253 = vld [vmem:[#allocation5] sm:$0xff]
    %v254 = vld [vmem:[#allocation5 + $0x8] sm:$0xff]
    %v255 = vld [vmem:[#allocation5 + $0x10] sm:$0xff]
    %v256 = vld [vmem:[#allocation5 + $0x18] sm:$0xff]
    %v257 = vld [vmem:[#allocation5 + $0x20] sm:$0xff]
    %v258 = vld [vmem:[#allocation5 + $0x28] sm:$0xff]
    %v259 = vld [vmem:[#allocation5 + $0x30] sm:$0xff]
    %v260 = vld [vmem:[#allocation5 + $0x38] sm:$0xff]
    %v261 = vld [vmem:[#allocation5 + $0x40] sm:$0xff]
    %v262 = vld [vmem:[#allocation5 + $0x48] sm:$0xff]
    %v263 = vld [vmem:[#allocation5 + $0x50] sm:$0xff]
    %v264 = vld [vmem:[#allocation5 + $0x58] sm:$0xff]
    %v265 = vld [vmem:[#allocation5 + $0x60] sm:$0xff]
    %v266 = vld [vmem:[#allocation5 + $0x68] sm:$0xff]
    %v267 = vld [vmem:[#allocation5 + $0x70] sm:$0xff]
    %v268 = vld [vmem:[#allocation5 + $0x78] sm:$0xff]
    %v269 = vld [vmem:[#allocation5 + $0x80] sm:$0xff]
    %v270 = vld [vmem:[#allocation5 + $0x88] sm:$0xff]
    %v271 = vld [vmem:[#allocation5 + $0x90] sm:$0xff]
    %v272 = vld [vmem:[#allocation5 + $0x98] sm:$0xff]
    %v273 = vld [vmem:[#allocation5 + $0xa0] sm:$0xff]
    %v274 = vld [vmem:[#allocation5 + $0xa8] sm:$0xff]
    %v275 = vld [vmem:[#allocation5 + $0xb0] sm:$0xff]
    %v276 = vld [vmem:[#allocation5 + $0xb8] sm:$0xff]
    %v277 = vld [vmem:[#allocation5 + $0xc0] sm:$0xff]
    %v278 = vld [vmem:[#allocation5 + $0xc8] sm:$0xff]
    %v279 = vld [vmem:[#allocation5 + $0xd0] sm:$0xff]
    %v280 = vld [vmem:[#allocation5 + $0xd8] sm:$0xff]
    %v281 = vld [vmem:[#allocation5 + $0xe0] sm:$0xff]
    %v282 = vld [vmem:[#allocation5 + $0xe8] sm:$0xff]
    %v283 = vld [vmem:[#allocation5 + $0xf0] sm:$0xff]
    %v284 = vld [vmem:[#allocation5 + $0xf8] sm:$0xff]
    %v285 = vld [vmem:[#allocation5 + $0x100] sm:$0xff]
    %v286 = vld [vmem:[#allocation5 + $0x108] sm:$0xff]
    %v287 = vld [vmem:[#allocation5 + $0x110] sm:$0xff]
    %v288 = vld [vmem:[#allocation5 + $0x118] sm:$0xff]
    %v289 = vld [vmem:[#allocation5 + $0x120] sm:$0xff]
    %v290 = vld [vmem:[#allocation5 + $0x128] sm:$0xff]
    %v291 = vld [vmem:[#allocation5 + $0x130] sm:$0xff]
    %v292 = vld [vmem:[#allocation5 + $0x138] sm:$0xff]
    %v293 = vld [vmem:[#allocation5 + $0x140] sm:$0xff]
    %v294 = vld [vmem:[#allocation5 + $0x148] sm:$0xff]
    %v295 = vld [vmem:[#allocation5 + $0x150] sm:$0xff]
    %v296 = vld [vmem:[#allocation5 + $0x158] sm:$0xff]
    %v297 = vld [vmem:[#allocation5 + $0x160] sm:$0xff]
    %v298 = vld [vmem:[#allocation5 + $0x168] sm:$0xff]
    %v299 = vld [vmem:[#allocation5 + $0x170] sm:$0xff]
    %v300 = vld [vmem:[#allocation5 + $0x178] sm:$0xff]
    %v301 = vld [vmem:[#allocation5 + $0x180] sm:$0xff]
    %v302 = vld [vmem:[#allocation5 + $0x188] sm:$0xff]
    %v303 = vld [vmem:[#allocation5 + $0x190] sm:$0xff]
    %v304 = vld [vmem:[#allocation5 + $0x198] sm:$0xff]
    %v305 = vld [vmem:[#allocation5 + $0x1a0] sm:$0xff]
    %v306 = vld [vmem:[#allocation5 + $0x1a8] sm:$0xff]
    %v307 = vld [vmem:[#allocation5 + $0x1b0] sm:$0xff]
    %v308 = vld [vmem:[#allocation5 + $0x1b8] sm:$0xff]
    %v309 = vld [vmem:[#allocation5 + $0x1c0] sm:$0xff]
    %v310 = vld [vmem:[#allocation5 + $0x1c8] sm:$0xff]
    %v311 = vld [vmem:[#allocation5 + $0x1d0] sm:$0xff]
    %v312 = vld [vmem:[#allocation5 + $0x1d8] sm:$0xff]
    %v313 = vld [vmem:[#allocation5 + $0x1e0] sm:$0xff]
    %v314 = vld [vmem:[#allocation5 + $0x1e8] sm:$0xff]
    %v315 = vld [vmem:[#allocation5 + $0x1f0] sm:$0xff]
    %v316 = vld [vmem:[#allocation5 + $0x1f8] sm:$0xff]
    %v317 = vld [vmem:[%s4] sm:$0x3]
    %v319 = vperm.slane %v317, 0
    %v320 = vperm.slane %v317, 1
    %v387 = vunpack.c.l.b16 %v253
    %v388 = vunpack.c.h.b16 %v253
    %v389 = vunpack.c.l.b16 %v254
    %v390 = vunpack.c.h.b16 %v254
    %v391 = vunpack.c.l.b16 %v255
    %v392 = vunpack.c.h.b16 %v255
    %v393 = vunpack.c.l.b16 %v256
    %v394 = vunpack.c.h.b16 %v256
    %v395 = vunpack.c.l.b16 %v257
    %v396 = vunpack.c.h.b16 %v257
    %v397 = vunpack.c.l.b16 %v258
    %v398 = vunpack.c.h.b16 %v258
    %v399 = vunpack.c.l.b16 %v259
    %v400 = vunpack.c.h.b16 %v259
    %v401 = vunpack.c.l.b16 %v260
    %v402 = vunpack.c.h.b16 %v260
    %v403 = vunpack.c.l.b16 %v261
    %v404 = vunpack.c.h.b16 %v261
    %v405 = vunpack.c.l.b16 %v262
    %v406 = vunpack.c.h.b16 %v262
    %v407 = vunpack.c.l.b16 %v263
    %v408 = vunpack.c.h.b16 %v263
    %v409 = vunpack.c.l.b16 %v264
    %v410 = vunpack.c.h.b16 %v264
    %v411 = vunpack.c.l.b16 %v265
    %v412 = vunpack.c.h.b16 %v265
    %v413 = vunpack.c.l.b16 %v266
    %v414 = vunpack.c.h.b16 %v266
    %v415 = vunpack.c.l.b16 %v267
    %v416 = vunpack.c.h.b16 %v267
    %v417 = vunpack.c.l.b16 %v268
    %v418 = vunpack.c.h.b16 %v268
    %v419 = vunpack.c.l.b16 %v269
    %v420 = vunpack.c.h.b16 %v269
    %v421 = vunpack.c.l.b16 %v270
    %v422 = vunpack.c.h.b16 %v270
    %v423 = vunpack.c.l.b16 %v271
    %v424 = vunpack.c.h.b16 %v271
    %v425 = vunpack.c.l.b16 %v272
    %v426 = vunpack.c.h.b16 %v272
    %v427 = vunpack.c.l.b16 %v273
    %v428 = vunpack.c.h.b16 %v273
    %v429 = vunpack.c.l.b16 %v274
    %v430 = vunpack.c.h.b16 %v274
    %v431 = vunpack.c.l.b16 %v275
    %v432 = vunpack.c.h.b16 %v275
    %v433 = vunpack.c.l.b16 %v276
    %v434 = vunpack.c.h.b16 %v276
    %v435 = vunpack.c.l.b16 %v277
    %v436 = vunpack.c.h.b16 %v277
    %v437 = vunpack.c.l.b16 %v278
    %v438 = vunpack.c.h.b16 %v278
    %v439 = vunpack.c.l.b16 %v279
    %v440 = vunpack.c.h.b16 %v279
    %v441 = vunpack.c.l.b16 %v280
    %v442 = vunpack.c.h.b16 %v280
    %v443 = vunpack.c.l.b16 %v281
    %v444 = vunpack.c.h.b16 %v281
    %v445 = vunpack.c.l.b16 %v282
    %v446 = vunpack.c.h.b16 %v282
    %v447 = vunpack.c.l.b16 %v283
    %v448 = vunpack.c.h.b16 %v283
    %v449 = vunpack.c.l.b16 %v284
    %v450 = vunpack.c.h.b16 %v284
    %v451 = vunpack.c.l.b16 %v285
    %v452 = vunpack.c.h.b16 %v285
    %v453 = vunpack.c.l.b16 %v286
    %v454 = vunpack.c.h.b16 %v286
    %v455 = vunpack.c.l.b16 %v287
    %v456 = vunpack.c.h.b16 %v287
    %v457 = vunpack.c.l.b16 %v288
    %v458 = vunpack.c.h.b16 %v288
    %v459 = vunpack.c.l.b16 %v289
    %v460 = vunpack.c.h.b16 %v289
    %v461 = vunpack.c.l.b16 %v290
    %v462 = vunpack.c.h.b16 %v290
    %v463 = vunpack.c.l.b16 %v291
    %v464 = vunpack.c.h.b16 %v291
    %v465 = vunpack.c.l.b16 %v292
    %v466 = vunpack.c.h.b16 %v292
    %v467 = vunpack.c.l.b16 %v293
    %v468 = vunpack.c.h.b16 %v293
    %v469 = vunpack.c.l.b16 %v294
    %v470 = vunpack.c.h.b16 %v294
    %v471 = vunpack.c.l.b16 %v295
    %v472 = vunpack.c.h.b16 %v295
    %v473 = vunpack.c.l.b16 %v296
    %v474 = vunpack.c.h.b16 %v296
    %v475 = vunpack.c.l.b16 %v297
    %v476 = vunpack.c.h.b16 %v297
    %v477 = vunpack.c.l.b16 %v298
    %v478 = vunpack.c.h.b16 %v298
    %v479 = vunpack.c.l.b16 %v299
    %v480 = vunpack.c.h.b16 %v299
    %v481 = vunpack.c.l.b16 %v300
    %v482 = vunpack.c.h.b16 %v300
    %v483 = vunpack.c.l.b16 %v301
    %v484 = vunpack.c.h.b16 %v301
    %v485 = vunpack.c.l.b16 %v302
    %v486 = vunpack.c.h.b16 %v302
    %v487 = vunpack.c.l.b16 %v303
    %v488 = vunpack.c.h.b16 %v303
    %v489 = vunpack.c.l.b16 %v304
    %v490 = vunpack.c.h.b16 %v304
    %v491 = vunpack.c.l.b16 %v305
    %v492 = vunpack.c.h.b16 %v305
    %v493 = vunpack.c.l.b16 %v306
    %v494 = vunpack.c.h.b16 %v306
    %v495 = vunpack.c.l.b16 %v307
    %v496 = vunpack.c.h.b16 %v307
    %v497 = vunpack.c.l.b16 %v308
    %v498 = vunpack.c.h.b16 %v308
    %v499 = vunpack.c.l.b16 %v309
    %v500 = vunpack.c.h.b16 %v309
    %v501 = vunpack.c.l.b16 %v310
    %v502 = vunpack.c.h.b16 %v310
    %v503 = vunpack.c.l.b16 %v311
    %v504 = vunpack.c.h.b16 %v311
    %v505 = vunpack.c.l.b16 %v312
    %v506 = vunpack.c.h.b16 %v312
    %v507 = vunpack.c.l.b16 %v313
    %v508 = vunpack.c.h.b16 %v313
    %v509 = vunpack.c.l.b16 %v314
    %v510 = vunpack.c.h.b16 %v314
    %v511 = vunpack.c.l.b16 %v315
    %v512 = vunpack.c.h.b16 %v315
    %v513 = vunpack.c.l.b16 %v316
    %v514 = vunpack.c.h.b16 %v316
    %v515 = vpack.c.b16 %v389, %v387
    %v516 = vpack.c.b16 %v390, %v388
    %v517 = vpack.c.b16 %v393, %v391
    %v518 = vpack.c.b16 %v394, %v392
    %v519 = vpack.c.b16 %v397, %v395
    %v520 = vpack.c.b16 %v398, %v396
    %v521 = vpack.c.b16 %v401, %v399
    %v522 = vpack.c.b16 %v402, %v400
    %v523 = vpack.c.b16 %v405, %v403
    %v524 = vpack.c.b16 %v406, %v404
    %v525 = vpack.c.b16 %v409, %v407
    %v526 = vpack.c.b16 %v410, %v408
    %v527 = vpack.c.b16 %v413, %v411
    %v528 = vpack.c.b16 %v414, %v412
    %v529 = vpack.c.b16 %v417, %v415
    %v530 = vpack.c.b16 %v418, %v416
    %v531 = vpack.c.b16 %v421, %v419
    %v532 = vpack.c.b16 %v422, %v420
    %v533 = vpack.c.b16 %v425, %v423
    %v534 = vpack.c.b16 %v426, %v424
    %v535 = vpack.c.b16 %v429, %v427
    %v536 = vpack.c.b16 %v430, %v428
    %v537 = vpack.c.b16 %v433, %v431
    %v538 = vpack.c.b16 %v434, %v432
    %v539 = vpack.c.b16 %v437, %v435
    %v540 = vpack.c.b16 %v438, %v436
    %v541 = vpack.c.b16 %v441, %v439
    %v542 = vpack.c.b16 %v442, %v440
    %v543 = vpack.c.b16 %v445, %v443
    %v544 = vpack.c.b16 %v446, %v444
    %v545 = vpack.c.b16 %v449, %v447
    %v546 = vpack.c.b16 %v450, %v448
    %v547 = vpack.c.b16 %v453, %v451
    %v548 = vpack.c.b16 %v454, %v452
    %v549 = vpack.c.b16 %v457, %v455
    %v550 = vpack.c.b16 %v458, %v456
    %v551 = vpack.c.b16 %v461, %v459
    %v552 = vpack.c.b16 %v462, %v460
    %v553 = vpack.c.b16 %v465, %v463
    %v554 = vpack.c.b16 %v466, %v464
    %v555 = vpack.c.b16 %v469, %v467
    %v556 = vpack.c.b16 %v470, %v468
    %v557 = vpack.c.b16 %v473, %v471
    %v558 = vpack.c.b16 %v474, %v472
    %v559 = vpack.c.b16 %v477, %v475
    %v560 = vpack.c.b16 %v478, %v476
    %v561 = vpack.c.b16 %v481, %v479
    %v562 = vpack.c.b16 %v482, %v480
    %v563 = vpack.c.b16 %v485, %v483
    %v564 = vpack.c.b16 %v486, %v484
    %v565 = vpack.c.b16 %v489, %v487
    %v566 = vpack.c.b16 %v490, %v488
    %v567 = vpack.c.b16 %v493, %v491
    %v568 = vpack.c.b16 %v494, %v492
    %v569 = vpack.c.b16 %v497, %v495
    %v570 = vpack.c.b16 %v498, %v496
    %v571 = vpack.c.b16 %v501, %v499
    %v572 = vpack.c.b16 %v502, %v500
    %v573 = vpack.c.b16 %v505, %v503
    %v574 = vpack.c.b16 %v506, %v504
    %v575 = vpack.c.b16 %v509, %v507
    %v576 = vpack.c.b16 %v510, %v508
    %v577 = vpack.c.b16 %v513, %v511
    %v578 = vpack.c.b16 %v514, %v512
    %643 = vmatpush.bf16.msra.mxu0 %v529
    %644 = vmatpush.bf16.msra.mxu0 %v527
    %645 = vmatpush.bf16.msra.mxu0 %v525
    %646 = vmatpush.bf16.msra.mxu0 %v523
    %647 = vmatpush.bf16.msra.mxu0 %v521
    %648 = vmatpush.bf16.msra.mxu0 %v519
    %649 = vmatpush.bf16.msra.mxu0 %v517
    %650 = vmatpush.bf16.msra.mxu0 %v515
    %651 = vmatmul.bf16.gmra.mxu0 %v249
    %v652 = vpop.f32.mrf.mxu0
    %v653 = vadd.f32 %v319, %v652
    %v654 = vpop.f32.mrf.mxu0
    %655 = vdwg.mxu0
    %656 = vmatpush.bf16.msra.mxu0 %v545
    %657 = vmatpush.bf16.msra.mxu0 %v543
    %658 = vmatpush.bf16.msra.mxu0 %v541
    %659 = vmatpush.bf16.msra.mxu0 %v539
    %660 = vmatpush.bf16.msra.mxu0 %v537
    %661 = vmatpush.bf16.msra.mxu0 %v535
    %662 = vmatpush.bf16.msra.mxu0 %v533
    %663 = vmatpush.bf16.msra.mxu0 %v531
    %664 = vmatmul.bf16.gmra.mxu0 %v250
    %v665 = vpop.f32.mrf.mxu0
    %v666 = vadd.f32 %v653, %v665
    %v667 = vpop.f32.mrf.mxu0
    %668 = vdwg.mxu0
    %669 = vmatpush.bf16.msra.mxu0 %v561
    %670 = vmatpush.bf16.msra.mxu0 %v559
    %671 = vmatpush.bf16.msra.mxu0 %v557
    %672 = vmatpush.bf16.msra.mxu0 %v555
    %673 = vmatpush.bf16.msra.mxu0 %v553
    %674 = vmatpush.bf16.msra.mxu0 %v551
    %675 = vmatpush.bf16.msra.mxu0 %v549
    %676 = vmatpush.bf16.msra.mxu0 %v547
    %677 = vmatmul.bf16.gmra.mxu0 %v251
    %v678 = vpop.f32.mrf.mxu0
    %v679 = vadd.f32 %v666, %v678
    %v680 = vpop.f32.mrf.mxu0
    %681 = vdwg.mxu0
    %682 = vmatpush.bf16.msra.mxu0 %v577
    %683 = vmatpush.bf16.msra.mxu0 %v575
    %684 = vmatpush.bf16.msra.mxu0 %v573
    %685 = vmatpush.bf16.msra.mxu0 %v571
    %686 = vmatpush.bf16.msra.mxu0 %v569
    %687 = vmatpush.bf16.msra.mxu0 %v567
    %688 = vmatpush.bf16.msra.mxu0 %v565
    %689 = vmatpush.bf16.msra.mxu0 %v563
    %690 = vmatmul.bf16.gmra.mxu0 %v252
    %v691 = vpop.f32.mrf.mxu0
    %v692 = vadd.f32 %v679, %v691
    %v693 = vpop.f32.mrf.mxu0
    %694 = vdwg.mxu0
    %695 = vmatpush.bf16.msra.mxu0 %v530
    %696 = vmatpush.bf16.msra.mxu0 %v528
    %697 = vmatpush.bf16.msra.mxu0 %v526
    %698 = vmatpush.bf16.msra.mxu0 %v524
    %699 = vmatpush.bf16.msra.mxu0 %v522
    %700 = vmatpush.bf16.msra.mxu0 %v520
    %701 = vmatpush.bf16.msra.mxu0 %v518
    %702 = vmatpush.bf16.msra.mxu0 %v516
    %703 = vmatmul.bf16.gmra.mxu0 %v249
    %v704 = vpop.f32.mrf.mxu0
    %v705 = vadd.f32 %v320, %v704
    %v706 = vpop.f32.mrf.mxu0
    %707 = vdwg.mxu0
    %708 = vmatpush.bf16.msra.mxu0 %v546
    %709 = vmatpush.bf16.msra.mxu0 %v544
    %710 = vmatpush.bf16.msra.mxu0 %v542
    %711 = vmatpush.bf16.msra.mxu0 %v540
    %712 = vmatpush.bf16.msra.mxu0 %v538
    %713 = vmatpush.bf16.msra.mxu0 %v536
    %714 = vmatpush.bf16.msra.mxu0 %v534
    %715 = vmatpush.bf16.msra.mxu0 %v532
    %716 = vmatmul.bf16.gmra.mxu0 %v250
    %v717 = vpop.f32.mrf.mxu0
    %v718 = vadd.f32 %v705, %v717
    %v719 = vpop.f32.mrf.mxu0
    %720 = vdwg.mxu0
    %721 = vmatpush.bf16.msra.mxu0 %v562
    %722 = vmatpush.bf16.msra.mxu0 %v560
    %723 = vmatpush.bf16.msra.mxu0 %v558
    %724 = vmatpush.bf16.msra.mxu0 %v556
    %725 = vmatpush.bf16.msra.mxu0 %v554
    %726 = vmatpush.bf16.msra.mxu0 %v552
    %727 = vmatpush.bf16.msra.mxu0 %v550
    %728 = vmatpush.bf16.msra.mxu0 %v548
    %729 = vmatmul.bf16.gmra.mxu0 %v251
    %v730 = vpop.f32.mrf.mxu0
    %v731 = vadd.f32 %v718, %v730
    %v732 = vpop.f32.mrf.mxu0
    %733 = vdwg.mxu0
    %734 = vmatpush.bf16.msra.mxu0 %v578
    %735 = vmatpush.bf16.msra.mxu0 %v576
    %736 = vmatpush.bf16.msra.mxu0 %v574
    %737 = vmatpush.bf16.msra.mxu0 %v572
    %738 = vmatpush.bf16.msra.mxu0 %v570
    %739 = vmatpush.bf16.msra.mxu0 %v568
    %740 = vmatpush.bf16.msra.mxu0 %v566
    %741 = vmatpush.bf16.msra.mxu0 %v564
    %742 = vmatmul.bf16.gmra.mxu0 %v252
    %v743 = vpop.f32.mrf.mxu0
    %v744 = vadd.f32 %v731, %v743
    %v745 = vpop.f32.mrf.mxu0
    %746 = vdwg.mxu0
    %v747 = vmax.f32 %v692, 0.0
    %v748 = vmax.f32 %v744, 0.0
    %v749 = vpack.c.bf16 %v747, %v747
    %v750 = vpack.c.bf16 %v748, %v748
    %v751 = vld [vmem:[#allocation7] sm:$0xf]
    %v752 = vld [vmem:[#allocation7 + $0x4] sm:$0xf]
    %v753 = vld [vmem:[#allocation7 + $0x8] sm:$0xf]
    %v754 = vld [vmem:[#allocation7 + $0xc] sm:$0xf]
    %v755 = vld [vmem:[#allocation7 + $0x10] sm:$0xf]
    %v756 = vld [vmem:[#allocation7 + $0x14] sm:$0xf]
    %v757 = vld [vmem:[#allocation7 + $0x18] sm:$0xf]
    %v758 = vld [vmem:[#allocation7 + $0x1c] sm:$0xf]
    %v759 = vld [vmem:[#allocation7 + $0x20] sm:$0xf]
    %v760 = vld [vmem:[#allocation7 + $0x24] sm:$0xf]
    %v761 = vld [vmem:[#allocation7 + $0x28] sm:$0xf]
    %v762 = vld [vmem:[#allocation7 + $0x2c] sm:$0xf]
    %v763 = vld [vmem:[#allocation7 + $0x30] sm:$0xf]
    %v764 = vld [vmem:[#allocation7 + $0x34] sm:$0xf]
    %v765 = vld [vmem:[#allocation7 + $0x38] sm:$0xf]
    %v766 = vld [vmem:[#allocation7 + $0x3c] sm:$0xf]
    %v767 = vld [vmem:[#allocation7 + $0x40] sm:$0xf]
    %v768 = vld [vmem:[#allocation7 + $0x44] sm:$0xf]
    %v769 = vld [vmem:[#allocation7 + $0x48] sm:$0xf]
    %v770 = vld [vmem:[#allocation7 + $0x4c] sm:$0xf]
    %v771 = vld [vmem:[#allocation7 + $0x50] sm:$0xf]
    %v772 = vld [vmem:[#allocation7 + $0x54] sm:$0xf]
    %v773 = vld [vmem:[#allocation7 + $0x58] sm:$0xf]
    %v774 = vld [vmem:[#allocation7 + $0x5c] sm:$0xf]
    %v775 = vld [vmem:[#allocation7 + $0x60] sm:$0xf]
    %v776 = vld [vmem:[#allocation7 + $0x64] sm:$0xf]
    %v777 = vld [vmem:[#allocation7 + $0x68] sm:$0xf]
    %v778 = vld [vmem:[#allocation7 + $0x6c] sm:$0xf]
    %v779 = vld [vmem:[#allocation7 + $0x70] sm:$0xf]
    %v780 = vld [vmem:[#allocation7 + $0x74] sm:$0xf]
    %v781 = vld [vmem:[#allocation7 + $0x78] sm:$0xf]
    %v782 = vld [vmem:[#allocation7 + $0x7c] sm:$0xf]
    %v783 = vld [vmem:[%s6] sm:$0x1]
    %v785 = vperm.slane %v783, 0
    %v819 = vunpack.c.l.b16 %v751
    %v820 = vunpack.c.l.b16 %v752
    %v821 = vunpack.c.l.b16 %v753
    %v822 = vunpack.c.l.b16 %v754
    %v823 = vunpack.c.l.b16 %v755
    %v824 = vunpack.c.l.b16 %v756
    %v825 = vunpack.c.l.b16 %v757
    %v826 = vunpack.c.l.b16 %v758
    %v827 = vunpack.c.l.b16 %v759
    %v828 = vunpack.c.l.b16 %v760
    %v829 = vunpack.c.l.b16 %v761
    %v830 = vunpack.c.l.b16 %v762
    %v831 = vunpack.c.l.b16 %v763
    %v832 = vunpack.c.l.b16 %v764
    %v833 = vunpack.c.l.b16 %v765
    %v834 = vunpack.c.l.b16 %v766
    %v835 = vunpack.c.l.b16 %v767
    %v836 = vunpack.c.l.b16 %v768
    %v837 = vunpack.c.l.b16 %v769
    %v838 = vunpack.c.l.b16 %v770
    %v839 = vunpack.c.l.b16 %v771
    %v840 = vunpack.c.l.b16 %v772
    %v841 = vunpack.c.l.b16 %v773
    %v842 = vunpack.c.l.b16 %v774
    %v843 = vunpack.c.l.b16 %v775
    %v844 = vunpack.c.l.b16 %v776
    %v845 = vunpack.c.l.b16 %v777
    %v846 = vunpack.c.l.b16 %v778
    %v847 = vunpack.c.l.b16 %v779
    %v848 = vunpack.c.l.b16 %v780
    %v849 = vunpack.c.l.b16 %v781
    %v850 = vunpack.c.l.b16 %v782
    %v851 = vpack.c.b16 %v820, %v819
    %v852 = vpack.c.b16 %v822, %v821
    %v853 = vpack.c.b16 %v824, %v823
    %v854 = vpack.c.b16 %v826, %v825
    %v855 = vpack.c.b16 %v828, %v827
    %v856 = vpack.c.b16 %v830, %v829
    %v857 = vpack.c.b16 %v832, %v831
    %v858 = vpack.c.b16 %v834, %v833
    %v859 = vpack.c.b16 %v836, %v835
    %v860 = vpack.c.b16 %v838, %v837
    %v861 = vpack.c.b16 %v840, %v839
    %v862 = vpack.c.b16 %v842, %v841
    %v863 = vpack.c.b16 %v844, %v843
    %v864 = vpack.c.b16 %v846, %v845
    %v865 = vpack.c.b16 %v848, %v847
    %v866 = vpack.c.b16 %v850, %v849
    %883 = vmatpush.bf16.msra.mxu0 %v858
    %884 = vmatpush.bf16.msra.mxu0 %v857
    %885 = vmatpush.bf16.msra.mxu0 %v856
    %886 = vmatpush.bf16.msra.mxu0 %v855
    %887 = vmatpush.bf16.msra.mxu0 %v854
    %888 = vmatpush.bf16.msra.mxu0 %v853
    %889 = vmatpush.bf16.msra.mxu0 %v852
    %890 = vmatpush.bf16.msra.mxu0 %v851
    %891 = vmatmul.bf16.gmra.mxu0 %v749
    %v892 = vpop.f32.mrf.mxu0
    %v893 = vadd.f32 %v785, %v892
    %v894 = vpop.f32.mrf.mxu0
    %895 = vdwg.mxu0
    %896 = vmatpush.bf16.msra.mxu0 %v866
    %897 = vmatpush.bf16.msra.mxu0 %v865
    %898 = vmatpush.bf16.msra.mxu0 %v864
    %899 = vmatpush.bf16.msra.mxu0 %v863
    %900 = vmatpush.bf16.msra.mxu0 %v862
    %901 = vmatpush.bf16.msra.mxu0 %v861
    %902 = vmatpush.bf16.msra.mxu0 %v860
    %903 = vmatpush.bf16.msra.mxu0 %v859
    %904 = vmatmul.bf16.gmra.mxu0 %v750
    %v905 = vpop.f32.mrf.mxu0
    %v906 = vadd.f32 %v893, %v905
    %v907 = vpop.f32.mrf.mxu0
    %908 = vdwg.mxu0
    %v909 = vmax.f32 %v906, 0.0
    %v910 = vpack.c.bf16 %v909, %v909
    %v911 = vld [vmem:[%s7] sm:$0xf]
    %v912 = vld [vmem:[%s7 + $0x4] sm:$0xf]
    %v913 = vld [vmem:[%s7 + $0x8] sm:$0xf]
    %v914 = vld [vmem:[%s7 + $0xc] sm:$0xf]
    %v915 = vld [vmem:[%s7 + $0x10] sm:$0xf]
    %v916 = vld [vmem:[%s7 + $0x14] sm:$0xf]
    %v917 = vld [vmem:[%s7 + $0x18] sm:$0xf]
    %v918 = vld [vmem:[%s7 + $0x1c] sm:$0xf]
    %v919 = vld [vmem:[%s7 + $0x20] sm:$0xf]
    %v920 = vld [vmem:[%s7 + $0x24] sm:$0xf]
    %v921 = vld [vmem:[%s7 + $0x28] sm:$0xf]
    %v922 = vld [vmem:[%s7 + $0x2c] sm:$0xf]
    %v923 = vld [vmem:[%s7 + $0x30] sm:$0xf]
    %v924 = vld [vmem:[%s7 + $0x34] sm:$0xf]
    %v925 = vld [vmem:[%s7 + $0x38] sm:$0xf]
    %v926 = vld [vmem:[%s7 + $0x3c] sm:$0xf]
    %v927 = vld [vmem:[%s8] sm:$0x1]
    %v929 = vperm.slane %v927, 0
    %v947 = vunpack.c.l.b16 %v911
    %v948 = vunpack.c.l.b16 %v912
    %v949 = vunpack.c.l.b16 %v913
    %v950 = vunpack.c.l.b16 %v914
    %v951 = vunpack.c.l.b16 %v915
    %v952 = vunpack.c.l.b16 %v916
    %v953 = vunpack.c.l.b16 %v917
    %v954 = vunpack.c.l.b16 %v918
    %v955 = vunpack.c.l.b16 %v919
    %v956 = vunpack.c.l.b16 %v920
    %v957 = vunpack.c.l.b16 %v921
    %v958 = vunpack.c.l.b16 %v922
    %v959 = vunpack.c.l.b16 %v923
    %v960 = vunpack.c.l.b16 %v924
    %v961 = vunpack.c.l.b16 %v925
    %v962 = vunpack.c.l.b16 %v926
    %v963 = vpack.c.b16 %v948, %v947
    %v964 = vpack.c.b16 %v950, %v949
    %v965 = vpack.c.b16 %v952, %v951
    %v966 = vpack.c.b16 %v954, %v953
    %v967 = vpack.c.b16 %v956, %v955
    %v968 = vpack.c.b16 %v958, %v957
    %v969 = vpack.c.b16 %v960, %v959
    %v970 = vpack.c.b16 %v962, %v961
    %979 = vmatpush.bf16.msra.mxu0 %v970
    %980 = vmatpush.bf16.msra.mxu0 %v969
    %981 = vmatpush.bf16.msra.mxu0 %v968
    %982 = vmatpush.bf16.msra.mxu0 %v967
    %983 = vmatpush.bf16.msra.mxu0 %v966
    %984 = vmatpush.bf16.msra.mxu0 %v965
    %985 = vmatpush.bf16.msra.mxu0 %v964
    %986 = vmatpush.bf16.msra.mxu0 %v963
    %987 = vmatmul.bf16.gmra.mxu0 %v910
    %v988 = vpop.f32.mrf.mxu0
    %v989 = vadd.f32 %v929, %v988
    %v990 = vpop.f32.mrf.mxu0
    %991 = vdwg.mxu0
    %vm992 = vcmask 261120
    %993 = vst.msk [vmem:[#allocation8] sm:$0xff] %vm992, %v989
    // Predicated region
    $region50: #{mlp_encoder.1} parent=1 // pred_check
      _
    $region51: #{mlp_encoder.1} parent=1 // pred_check_branch
      %995 = sbr.rel (0) target = $region53
    $region52: #{mlp_encoder.1} parent=1 // pred_region
      %997 = vsyncadd [#allocation4], 0
      %s999 = sshll.u32 [#allocation8], 4
      %s1000 = int_to_ptr.vmem [resolvable:$true] %s999
      %s1001 = sshll.u32 %s9, 4
      %s1002 = int_to_ptr.hbm [resolvable:$true] %s1001
      %1004 = dma.vmem_to_hbm [thread:$0]  %s1000, 128, %s1002, [#allocation4]
    $region53: #{mlp_encoder.1} parent=1 // pred_fallthru
      _
    // Predicated region
    $region54: #{mlp_encoder.1} parent=1 // pred_check
      _
    $region55: #{mlp_encoder.1} parent=1 // pred_check_branch
      %1006 = sbr.rel (0) target = $region57
    $region56: #{mlp_encoder.1} parent=1 // pred_region
      %1008 = dma.done [#allocation4], 128
    $region57: #{mlp_encoder.1} parent=1 // pred_fallthru
      _
    %1009 = vsyncpa [#allocation3], 1
    %1010 = vsyncpa [#allocation6], 1
    %1011 = vsyncpa [#allocation4], 1

</llo_original>
